<compile_context>
chip_gen: v7x
topology: tpu7x:2x2x1
jax: 0.10.0
libtpu: 0.0.40
codegen_flags: <defaults>
</compile_context>

<pallas_src>
import functools

import numpy as np
import jax
import jax.numpy as jnp
from jax.experimental import pallas as pl
from jax.experimental.pallas import tpu as pltpu


def _round_up(n, m):
    return ((n + m - 1) // m) * m


def _spline_constants(order, grid_range, grid_count):
    """Centers, zoom/pan and precomputed Cox-de Boor reciprocals (Python floats).

    inv_left[k][i] = 1 / (centers[i+k] - centers[i]) for k >= 1 only (the k = 0
    entry is an empty placeholder -- the recursion starts at k = 1; computing it
    eagerly was the previous ZeroDivisionError).
    """
    center_count = grid_count + order + 1
    # NOTE: divides by (grid_count - 1); grid_count must be > 1 (matches the module).
    end_center = grid_range[-1] + (grid_range[-1] - grid_range[0]) * (order + 1) / (grid_count - 1)
    centers = tuple(float(c) for c in np.linspace(grid_range[0], end_center, center_count))
    zoom = (grid_range[-1] - grid_range[0]) / 2.0
    pan = (grid_range[-1] + grid_range[0]) / 2.0
    inv_left = tuple(
        () if k == 0 else tuple(1.0 / (centers[i + k] - centers[i])
                                for i in range(center_count - k))
        for k in range(order + 1))
    return centers, zoom, pan, inv_left


def _kan_fused_kernel(x_ref, *refs, centers, inv_left, zoom, pan, order, mxu_dtype):
    """Fused forward over all layers for one batch tile (batch-on-lanes layout).

    x_ref : (I0_pad, TB)  f32 activations -- features on sublanes, batch on lanes.
    refs  : (w_ref_0, ..., w_ref_{L-1}, o_ref)
            w_ref_l : (J_l_pad, G * I_l_pad) fused weights with
                      W[j, g*I_pad + i] = coeff[j,i,g] * weight[j,i]
                      (zero in padded rows/cols), VMEM-resident.
            o_ref   : (J_last_pad, TB)
    """
    w_refs, o_ref = refs[:-1], refs[-1]
    cc = len(centers)

    def basis_concat(act):
        # tanh squash + Cox-de Boor recursion, all f32 on the VPU/EUP, on (I_pad, TB)
        # tiles; I_pad is a multiple of 8, so every temporary is only a few vregs.
        xx = jnp.tanh(act) * zoom + pan
        # Each comparison computed once; order-0 indicator = ge[i] & ~ge[i+1]
        # (== (x >= c_i) & (x < c_{i+1}); x at/above the last center -> all-zero row,
        #  matching the PyTorch module).
        ge = [xx >= c for c in centers]
        b = [(ge[i] & (~ge[i + 1])).astype(jnp.float32) for i in range(cc - 1)]
        # Statically unrolled recursion with precomputed reciprocals (no divides).
        # Right-hand term uses 1 - t[i+1] (exactly equal: same denominator), which
        # removes ~1/3 of the multiplies/subtracts per level.
        for k in range(1, order + 1):
            t = [(xx - centers[i]) * inv_left[k][i] for i in range(cc - k)]
            b = [t[i] * b[i] + (1.0 - t[i + 1]) * b[i + 1] for i in range(cc - k - 1)]
        # len(b) == grid_count, each (I_pad, TB); sublane-aligned concat -> (G*I_pad, TB).
        return jnp.concatenate(b, axis=0)

    act = x_ref[...].astype(jnp.float32)
    for w_ref in w_refs:                       # static unroll over layers
        basis = basis_concat(act).astype(mxu_dtype)
        # Single MXU contraction per layer: (J_pad, G*I_pad) x (G*I_pad, TB) -> (J_pad, TB).
        act = jnp.dot(w_ref[...], basis, preferred_element_type=jnp.float32)
    o_ref[...] = act


def precompute_fused_weights(params, *, grid_count, mxu_dtype=jnp.bfloat16, sub_align=8):
    """One-time host-side weight fusion (hoisted out of the per-forward path).

    Returns per-layer fused weights of shape (J_pad, G*I_pad) with
    W[j, g*I_pad + i] = coeff[j, i, g] * weight[j, i], zeros in padded rows/cols,
    plus the per-layer (I, J, I_pad, J_pad) sizes.
    """
    fused_ws, sizes = [], []
    for coeff, w in params:
        J, I, G = coeff.shape
        assert G == grid_count and w.shape == (J, I)
        Ip = _round_up(I, sub_align)
        Jp = _round_up(J, sub_align)
        f = coeff.astype(jnp.float32) * w.astype(jnp.float32)[:, :, None]   # (J, I, G)
        f = jnp.transpose(f, (0, 2, 1))                                     # (J, G, I)
        f = jnp.pad(f, ((0, Jp - J), (0, 0), (0, Ip - I)))
        fused_ws.append(f.reshape(Jp, G * Ip).astype(mxu_dtype))
        sizes.append((I, J, Ip, Jp))
    return fused_ws, sizes


def bspline_kan_forward(x, fused_ws, sizes, *, order=3, grid_range=(-1.0, 1.0),
                        grid_count=6, block_b_max=2048, min_grid_steps=2,
                        mxu_dtype=jnp.bfloat16):
    """Full BSplineKAN forward as one pallas_call (transposed, batch-on-lanes layout).

    x        : (B, I0) f32
    fused_ws : per-layer fused weights from precompute_fused_weights (same mxu_dtype).
    block_b_max    : batch-tile cap (lanes); larger tiles amortize per-step overhead
                     on v5e/v6e (128 MiB VMEM).
    min_grid_steps : keep >= this many grid steps when batch allows (2 feeds both
                     v7x TensorCores via the 'parallel' grid axis; use 1 on v5e/v6e).
    mxu_dtype      : MXU operand dtype (f32 accumulate). bf16 halves weight bytes and
                     doubles MXU throughput; use f32 for exactness.
    """
    B, I0 = x.shape
    centers, zoom, pan, inv_left = _spline_constants(order, grid_range, grid_count)
    cc = len(centers)

    I0p = sizes[0][2]
    JL, JLp = sizes[-1][1], sizes[-1][3]
    assert I0 == sizes[0][0]
    for l in range(1, len(sizes)):
        assert sizes[l][0] == sizes[l - 1][1] and sizes[l][2] == sizes[l - 1][3]

    # ---- batch tiling: batch sits on the 128-lane axis ----
    Bp0 = _round_up(B, 128)
    bb = min(_round_up(block_b_max, 128), Bp0)
    if min_grid_steps > 1:
        bb = min(bb, max(128, _round_up(-(-Bp0 // min_grid_steps), 128)))
    bb = max(bb, 128)
    Bp = _round_up(B, bb)

    # Transposed + padded input: (I0_pad, Bp).  Padded feature rows / batch lanes
    # produce garbage basis values but hit exactly-zero weight columns (rows are
    # sliced off at the end), so real outputs are unchanged.
    x_t = jnp.pad(x.astype(jnp.float32).T, ((0, I0p - I0), (0, Bp - B)))

    # ---- VMEM budget from the actual tile/weight sizes (plus headroom) ----
    itm = jnp.dtype(mxu_dtype).itemsize
    bytes_io = 2 * (bb * I0p * 4 + bb * JLp * 4)                     # double-buffered x / out
    bytes_w = 2 * sum(gw.size * itm for gw in fused_ws)              # (default double-buffered)
    bytes_tmp = 0
    for (_, _, Ip, Jp) in sizes:
        per_layer = (2 * cc + 4) * Ip * bb * 4                       # ge / t / b temporaries
        per_layer += grid_count * Ip * bb * (4 + itm)                # concat basis + mxu copy
        per_layer += Jp * bb * 4                                     # layer output
        bytes_tmp = max(bytes_tmp, per_layer)
    try:
        vmem_cap = int(pltpu.get_tpu_info().vmem_capacity_bytes)
    except Exception:
        vmem_cap = 64 << 20                                          # conservative (v7x per-core)
    vmem_limit = int(min(max(2 * (bytes_io + bytes_w + bytes_tmp), 16 << 20),
                         int(0.75 * vmem_cap)))

    kernel = functools.partial(
        _kan_fused_kernel, centers=centers, inv_left=inv_left,
        zoom=zoom, pan=pan, order=order, mxu_dtype=mxu_dtype)

    out = pl.pallas_call(
        kernel,
        out_shape=jax.ShapeDtypeStruct((JLp, Bp), jnp.float32),
        grid=(Bp // bb,),
        in_specs=[pl.BlockSpec((I0p, bb), lambda i: (0, i))]
                 + [pl.BlockSpec(gw.shape, lambda i: (0, 0)) for gw in fused_ws],
        out_specs=pl.BlockSpec((JLp, bb), lambda i: (0, i)),
        compiler_params=pltpu.CompilerParams(
            dimension_semantics=("parallel",),    # batch blocks split across TCs (v7x megacore)
            vmem_limit_bytes=vmem_limit),
    )(x_t, *fused_ws)
    return out[:JL, :B].T


# ------------------------- pure-JAX reference (spec) -------------------------
def _reference_layer(x, coefficients, weights, order, grid_range, grid_count):
    center_count = grid_count + order + 1
    end_center = grid_range[-1] + (grid_range[-1] - grid_range[0]) * (order + 1) / (grid_count - 1)
    centers = np.linspace(grid_range[0], end_center, center_count)
    zoom = (grid_range[-1] - grid_range[0]) / 2.0
    pan = (grid_range[-1] + grid_range[0]) / 2.0
    xx = jnp.tanh(x) * zoom + pan
    b = jnp.stack([((xx >= centers[i]) & (xx < centers[i + 1])).astype(jnp.float32)
                   for i in range(center_count - 1)], axis=2)
    for k in range(1, order + 1):
        b = jnp.stack([
            (xx - centers[i]) / (centers[i + k] - centers[i]) * b[:, :, i]
            + (centers[i + k + 1] - xx) / (centers[i + k + 1] - centers[i + 1]) * b[:, :, i + 1]
            for i in range(center_count - k - 1)
        ], axis=2)
    transformed = jnp.einsum('big,oig->boi', b, coefficients)
    return jnp.einsum('boi,oi->bo', transformed, weights)


if __name__ == "__main__":
    order = 3
    grid_range = [-1.0, 1.0]
    grid_count = 6
    layer_sizes = [4, 8, 3]

    # Deterministic synthetic parameters (matching the module's __init__ shapes).
    key = jax.random.PRNGKey(0)
    params = []
    for li in range(1, len(layer_sizes)):
        key, kc, kw = jax.random.split(key, 3)
        in_sz, out_sz = layer_sizes[li - 1], layer_sizes[li]
        coeff = jax.random.normal(kc, (out_sz, in_sz, grid_count), jnp.float32) * 0.1
        w = jax.random.normal(kw, (out_sz, in_sz), jnp.float32)
        params.append((coeff, w))

    def ref_forward(xx):
        y = xx
        for coeff, w in params:
            y = _reference_layer(y, coeff, w, order, grid_range, grid_count)
        return y

    # --- exactness check: small batch, f32 MXU operands, tight tolerance ---
    fused_f32, sizes_f32 = precompute_fused_weights(params, grid_count=grid_count,
                                                    mxu_dtype=jnp.float32)
    key, kx = jax.random.split(key)
    x_small = jax.random.normal(kx, (8, layer_sizes[0]), jnp.float32)
    y_f32 = bspline_kan_forward(x_small, fused_f32, sizes_f32, order=order,
                                grid_range=grid_range, grid_count=grid_count,
                                mxu_dtype=jnp.float32)
    y_f32 = jax.block_until_ready(y_f32)
    np.testing.assert_allclose(np.asarray(y_f32), np.asarray(ref_forward(x_small)),
                               rtol=1e-4, atol=1e-5)
    assert y_f32.shape == (8, layer_sizes[-1])

    # --- throughput path: larger batch, >= 2 grid steps, bf16 MXU operands (f32 acc) ---
    fused_bf16, sizes_bf16 = precompute_fused_weights(params, grid_count=grid_count,
                                                      mxu_dtype=jnp.bfloat16)
    key, kx2 = jax.random.split(key)
    x_big = jax.random.normal(kx2, (256, layer_sizes[0]), jnp.float32)
    y_bf16 = bspline_kan_forward(x_big, fused_bf16, sizes_bf16, order=order,
                                 grid_range=grid_range, grid_count=grid_count,
                                 mxu_dtype=jnp.bfloat16)   # grid of 2 -> both v7x TensorCores
    y_bf16 = jax.block_until_ready(y_bf16)
    # Looser tolerance: bf16 matmul operands across two stacked layers.
    np.testing.assert_allclose(np.asarray(y_bf16), np.asarray(ref_forward(x_big)),
                               rtol=5e-2, atol=5e-2)
    assert y_bf16.shape == (256, layer_sizes[-1])

    print("KERNEL_OK")
</pallas_src>

<mosaic_0001>
module attributes {stable_mosaic.version = 11 : i64} {
  func.func @_kan_fused_kernel(%arg0: i32, %arg1: memref<8x128xf32, #tpu.memory_space<vmem>>, %arg2: memref<8x48xf32, #tpu.memory_space<vmem>>, %arg3: memref<8x48xf32, #tpu.memory_space<vmem>>, %arg4: memref<8x128xf32, #tpu.memory_space<vmem>>) attributes {dimension_semantics = [#tpu.dimension_semantics<parallel>], iteration_bounds = array<i64: 1>, scalar_prefetch = 0 : i64, scratch_operands = 0 : i64, tpu.core_type = #tpu.core_type<tc>, window_params = [{transform_indices = @transform_0, window_bounds = array<i64: 8, 128>}, {pipeline_mode = #tpu.pipeline_mode<synchronous>, transform_indices = @transform_1, window_bounds = array<i64: 8, 48>}, {pipeline_mode = #tpu.pipeline_mode<synchronous>, transform_indices = @transform_2, window_bounds = array<i64: 8, 48>}, {transform_indices = @transform_3, window_bounds = array<i64: 8, 128>}]} {
    %c0 = arith.constant 0 : index
    %c0_0 = arith.constant 0 : index
    %0 = vector.load %arg1[%c0, %c0_0] : memref<8x128xf32, #tpu.memory_space<vmem>>, vector<8x128xf32>
    %1 = math.tanh %0 : vector<8x128xf32>
    %cst = arith.constant 1.000000e+00 : f32
    %2 = vector.broadcast %cst : f32 to vector<8x128xf32>
    %3 = arith.mulf %1, %2 : vector<8x128xf32>
    %cst_1 = arith.constant 0.000000e+00 : f32
    %4 = vector.broadcast %cst_1 : f32 to vector<8x128xf32>
    %5 = arith.addf %3, %4 : vector<8x128xf32>
    %cst_2 = arith.constant -1.000000e+00 : f32
    %6 = vector.broadcast %cst_2 : f32 to vector<8x128xf32>
    %7 = arith.cmpf oge, %5, %6 : vector<8x128xf32>
    %cst_3 = arith.constant -6.000000e-01 : f32
    %8 = vector.broadcast %cst_3 : f32 to vector<8x128xf32>
    %9 = arith.cmpf oge, %5, %8 : vector<8x128xf32>
    %cst_4 = arith.constant -2.000000e-01 : f32
    %10 = vector.broadcast %cst_4 : f32 to vector<8x128xf32>
    %11 = arith.cmpf oge, %5, %10 : vector<8x128xf32>
    %cst_5 = arith.constant 2.000000e-01 : f32
    %12 = vector.broadcast %cst_5 : f32 to vector<8x128xf32>
    %13 = arith.cmpf oge, %5, %12 : vector<8x128xf32>
    %cst_6 = arith.constant 6.000000e-01 : f32
    %14 = vector.broadcast %cst_6 : f32 to vector<8x128xf32>
    %15 = arith.cmpf oge, %5, %14 : vector<8x128xf32>
    %cst_7 = arith.constant 1.000000e+00 : f32
    %16 = vector.broadcast %cst_7 : f32 to vector<8x128xf32>
    %17 = arith.cmpf oge, %5, %16 : vector<8x128xf32>
    %cst_8 = arith.constant 1.400000e+00 : f32
    %18 = vector.broadcast %cst_8 : f32 to vector<8x128xf32>
    %19 = arith.cmpf oge, %5, %18 : vector<8x128xf32>
    %cst_9 = arith.constant 1.800000e+00 : f32
    %20 = vector.broadcast %cst_9 : f32 to vector<8x128xf32>
    %21 = arith.cmpf oge, %5, %20 : vector<8x128xf32>
    %cst_10 = arith.constant 2.200000e+00 : f32
    %22 = vector.broadcast %cst_10 : f32 to vector<8x128xf32>
    %23 = arith.cmpf oge, %5, %22 : vector<8x128xf32>
    %cst_11 = arith.constant 2.600000e+00 : f32
    %24 = vector.broadcast %cst_11 : f32 to vector<8x128xf32>
    %25 = arith.cmpf oge, %5, %24 : vector<8x128xf32>
    %cst_12 = arith.constant dense<true> : vector<8x128xi1>
    %26 = arith.xori %9, %cst_12 : vector<8x128xi1>
    %27 = arith.andi %7, %26 : vector<8x128xi1>
    %28 = arith.extui %27 : vector<8x128xi1> to vector<8x128xi32>
    %29 = arith.sitofp %28 : vector<8x128xi32> to vector<8x128xf32>
    %cst_13 = arith.constant dense<true> : vector<8x128xi1>
    %30 = arith.xori %11, %cst_13 : vector<8x128xi1>
    %31 = arith.andi %9, %30 : vector<8x128xi1>
    %32 = arith.extui %31 : vector<8x128xi1> to vector<8x128xi32>
    %33 = arith.sitofp %32 : vector<8x128xi32> to vector<8x128xf32>
    %cst_14 = arith.constant dense<true> : vector<8x128xi1>
    %34 = arith.xori %13, %cst_14 : vector<8x128xi1>
    %35 = arith.andi %11, %34 : vector<8x128xi1>
    %36 = arith.extui %35 : vector<8x128xi1> to vector<8x128xi32>
    %37 = arith.sitofp %36 : vector<8x128xi32> to vector<8x128xf32>
    %cst_15 = arith.constant dense<true> : vector<8x128xi1>
    %38 = arith.xori %15, %cst_15 : vector<8x128xi1>
    %39 = arith.andi %13, %38 : vector<8x128xi1>
    %40 = arith.extui %39 : vector<8x128xi1> to vector<8x128xi32>
    %41 = arith.sitofp %40 : vector<8x128xi32> to vector<8x128xf32>
    %cst_16 = arith.constant dense<true> : vector<8x128xi1>
    %42 = arith.xori %17, %cst_16 : vector<8x128xi1>
    %43 = arith.andi %15, %42 : vector<8x128xi1>
    %44 = arith.extui %43 : vector<8x128xi1> to vector<8x128xi32>
    %45 = arith.sitofp %44 : vector<8x128xi32> to vector<8x128xf32>
    %cst_17 = arith.constant dense<true> : vector<8x128xi1>
    %46 = arith.xori %19, %cst_17 : vector<8x128xi1>
    %47 = arith.andi %17, %46 : vector<8x128xi1>
    %48 = arith.extui %47 : vector<8x128xi1> to vector<8x128xi32>
    %49 = arith.sitofp %48 : vector<8x128xi32> to vector<8x128xf32>
    %cst_18 = arith.constant dense<true> : vector<8x128xi1>
    %50 = arith.xori %21, %cst_18 : vector<8x128xi1>
    %51 = arith.andi %19, %50 : vector<8x128xi1>
    %52 = arith.extui %51 : vector<8x128xi1> to vector<8x128xi32>
    %53 = arith.sitofp %52 : vector<8x128xi32> to vector<8x128xf32>
    %cst_19 = arith.constant dense<true> : vector<8x128xi1>
    %54 = arith.xori %23, %cst_19 : vector<8x128xi1>
    %55 = arith.andi %21, %54 : vector<8x128xi1>
    %56 = arith.extui %55 : vector<8x128xi1> to vector<8x128xi32>
    %57 = arith.sitofp %56 : vector<8x128xi32> to vector<8x128xf32>
    %cst_20 = arith.constant dense<true> : vector<8x128xi1>
    %58 = arith.xori %25, %cst_20 : vector<8x128xi1>
    %59 = arith.andi %23, %58 : vector<8x128xi1>
    %60 = arith.extui %59 : vector<8x128xi1> to vector<8x128xi32>
    %61 = arith.sitofp %60 : vector<8x128xi32> to vector<8x128xf32>
    %cst_21 = arith.constant -1.000000e+00 : f32
    %62 = vector.broadcast %cst_21 : f32 to vector<8x128xf32>
    %63 = arith.subf %5, %62 : vector<8x128xf32>
    %cst_22 = arith.constant 2.500000e+00 : f32
    %64 = vector.broadcast %cst_22 : f32 to vector<8x128xf32>
    %65 = arith.mulf %63, %64 : vector<8x128xf32>
    %cst_23 = arith.constant -6.000000e-01 : f32
    %66 = vector.broadcast %cst_23 : f32 to vector<8x128xf32>
    %67 = arith.subf %5, %66 : vector<8x128xf32>
    %cst_24 = arith.constant 2.500000e+00 : f32
    %68 = vector.broadcast %cst_24 : f32 to vector<8x128xf32>
    %69 = arith.mulf %67, %68 : vector<8x128xf32>
    %cst_25 = arith.constant -2.000000e-01 : f32
    %70 = vector.broadcast %cst_25 : f32 to vector<8x128xf32>
    %71 = arith.subf %5, %70 : vector<8x128xf32>
    %cst_26 = arith.constant 2.500000e+00 : f32
    %72 = vector.broadcast %cst_26 : f32 to vector<8x128xf32>
    %73 = arith.mulf %71, %72 : vector<8x128xf32>
    %cst_27 = arith.constant 2.000000e-01 : f32
    %74 = vector.broadcast %cst_27 : f32 to vector<8x128xf32>
    %75 = arith.subf %5, %74 : vector<8x128xf32>
    %cst_28 = arith.constant 2.500000e+00 : f32
    %76 = vector.broadcast %cst_28 : f32 to vector<8x128xf32>
    %77 = arith.mulf %75, %76 : vector<8x128xf32>
    %cst_29 = arith.constant 6.000000e-01 : f32
    %78 = vector.broadcast %cst_29 : f32 to vector<8x128xf32>
    %79 = arith.subf %5, %78 : vector<8x128xf32>
    %cst_30 = arith.constant 2.500000e+00 : f32
    %80 = vector.broadcast %cst_30 : f32 to vector<8x128xf32>
    %81 = arith.mulf %79, %80 : vector<8x128xf32>
    %cst_31 = arith.constant 1.000000e+00 : f32
    %82 = vector.broadcast %cst_31 : f32 to vector<8x128xf32>
    %83 = arith.subf %5, %82 : vector<8x128xf32>
    %cst_32 = arith.constant 2.500000e+00 : f32
    %84 = vector.broadcast %cst_32 : f32 to vector<8x128xf32>
    %85 = arith.mulf %83, %84 : vector<8x128xf32>
    %cst_33 = arith.constant 1.400000e+00 : f32
    %86 = vector.broadcast %cst_33 : f32 to vector<8x128xf32>
    %87 = arith.subf %5, %86 : vector<8x128xf32>
    %cst_34 = arith.constant 2.500000e+00 : f32
    %88 = vector.broadcast %cst_34 : f32 to vector<8x128xf32>
    %89 = arith.mulf %87, %88 : vector<8x128xf32>
    %cst_35 = arith.constant 1.800000e+00 : f32
    %90 = vector.broadcast %cst_35 : f32 to vector<8x128xf32>
    %91 = arith.subf %5, %90 : vector<8x128xf32>
    %cst_36 = arith.constant 2.500000e+00 : f32
    %92 = vector.broadcast %cst_36 : f32 to vector<8x128xf32>
    %93 = arith.mulf %91, %92 : vector<8x128xf32>
    %cst_37 = arith.constant 2.200000e+00 : f32
    %94 = vector.broadcast %cst_37 : f32 to vector<8x128xf32>
    %95 = arith.subf %5, %94 : vector<8x128xf32>
    %cst_38 = arith.constant 2.500000e+00 : f32
    %96 = vector.broadcast %cst_38 : f32 to vector<8x128xf32>
    %97 = arith.mulf %95, %96 : vector<8x128xf32>
    %98 = arith.mulf %65, %29 : vector<8x128xf32>
    %cst_39 = arith.constant 1.000000e+00 : f32
    %99 = vector.broadcast %cst_39 : f32 to vector<8x128xf32>
    %100 = arith.subf %99, %69 : vector<8x128xf32>
    %101 = arith.mulf %100, %33 : vector<8x128xf32>
    %102 = arith.addf %98, %101 : vector<8x128xf32>
    %103 = arith.mulf %69, %33 : vector<8x128xf32>
    %cst_40 = arith.constant 1.000000e+00 : f32
    %104 = vector.broadcast %cst_40 : f32 to vector<8x128xf32>
    %105 = arith.subf %104, %73 : vector<8x128xf32>
    %106 = arith.mulf %105, %37 : vector<8x128xf32>
    %107 = arith.addf %103, %106 : vector<8x128xf32>
    %108 = arith.mulf %73, %37 : vector<8x128xf32>
    %cst_41 = arith.constant 1.000000e+00 : f32
    %109 = vector.broadcast %cst_41 : f32 to vector<8x128xf32>
    %110 = arith.subf %109, %77 : vector<8x128xf32>
    %111 = arith.mulf %110, %41 : vector<8x128xf32>
    %112 = arith.addf %108, %111 : vector<8x128xf32>
    %113 = arith.mulf %77, %41 : vector<8x128xf32>
    %cst_42 = arith.constant 1.000000e+00 : f32
    %114 = vector.broadcast %cst_42 : f32 to vector<8x128xf32>
    %115 = arith.subf %114, %81 : vector<8x128xf32>
    %116 = arith.mulf %115, %45 : vector<8x128xf32>
    %117 = arith.addf %113, %116 : vector<8x128xf32>
    %118 = arith.mulf %81, %45 : vector<8x128xf32>
    %cst_43 = arith.constant 1.000000e+00 : f32
    %119 = vector.broadcast %cst_43 : f32 to vector<8x128xf32>
    %120 = arith.subf %119, %85 : vector<8x128xf32>
    %121 = arith.mulf %120, %49 : vector<8x128xf32>
    %122 = arith.addf %118, %121 : vector<8x128xf32>
    %123 = arith.mulf %85, %49 : vector<8x128xf32>
    %cst_44 = arith.constant 1.000000e+00 : f32
    %124 = vector.broadcast %cst_44 : f32 to vector<8x128xf32>
    %125 = arith.subf %124, %89 : vector<8x128xf32>
    %126 = arith.mulf %125, %53 : vector<8x128xf32>
    %127 = arith.addf %123, %126 : vector<8x128xf32>
    %128 = arith.mulf %89, %53 : vector<8x128xf32>
    %cst_45 = arith.constant 1.000000e+00 : f32
    %129 = vector.broadcast %cst_45 : f32 to vector<8x128xf32>
    %130 = arith.subf %129, %93 : vector<8x128xf32>
    %131 = arith.mulf %130, %57 : vector<8x128xf32>
    %132 = arith.addf %128, %131 : vector<8x128xf32>
    %133 = arith.mulf %93, %57 : vector<8x128xf32>
    %cst_46 = arith.constant 1.000000e+00 : f32
    %134 = vector.broadcast %cst_46 : f32 to vector<8x128xf32>
    %135 = arith.subf %134, %97 : vector<8x128xf32>
    %136 = arith.mulf %135, %61 : vector<8x128xf32>
    %137 = arith.addf %133, %136 : vector<8x128xf32>
    %cst_47 = arith.constant -1.000000e+00 : f32
    %138 = vector.broadcast %cst_47 : f32 to vector<8x128xf32>
    %139 = arith.subf %5, %138 : vector<8x128xf32>
    %cst_48 = arith.constant 1.250000e+00 : f32
    %140 = vector.broadcast %cst_48 : f32 to vector<8x128xf32>
    %141 = arith.mulf %139, %140 : vector<8x128xf32>
    %cst_49 = arith.constant -6.000000e-01 : f32
    %142 = vector.broadcast %cst_49 : f32 to vector<8x128xf32>
    %143 = arith.subf %5, %142 : vector<8x128xf32>
    %cst_50 = arith.constant 1.250000e+00 : f32
    %144 = vector.broadcast %cst_50 : f32 to vector<8x128xf32>
    %145 = arith.mulf %143, %144 : vector<8x128xf32>
    %cst_51 = arith.constant -2.000000e-01 : f32
    %146 = vector.broadcast %cst_51 : f32 to vector<8x128xf32>
    %147 = arith.subf %5, %146 : vector<8x128xf32>
    %cst_52 = arith.constant 1.250000e+00 : f32
    %148 = vector.broadcast %cst_52 : f32 to vector<8x128xf32>
    %149 = arith.mulf %147, %148 : vector<8x128xf32>
    %cst_53 = arith.constant 2.000000e-01 : f32
    %150 = vector.broadcast %cst_53 : f32 to vector<8x128xf32>
    %151 = arith.subf %5, %150 : vector<8x128xf32>
    %cst_54 = arith.constant 1.250000e+00 : f32
    %152 = vector.broadcast %cst_54 : f32 to vector<8x128xf32>
    %153 = arith.mulf %151, %152 : vector<8x128xf32>
    %cst_55 = arith.constant 6.000000e-01 : f32
    %154 = vector.broadcast %cst_55 : f32 to vector<8x128xf32>
    %155 = arith.subf %5, %154 : vector<8x128xf32>
    %cst_56 = arith.constant 1.250000e+00 : f32
    %156 = vector.broadcast %cst_56 : f32 to vector<8x128xf32>
    %157 = arith.mulf %155, %156 : vector<8x128xf32>
    %cst_57 = arith.constant 1.000000e+00 : f32
    %158 = vector.broadcast %cst_57 : f32 to vector<8x128xf32>
    %159 = arith.subf %5, %158 : vector<8x128xf32>
    %cst_58 = arith.constant 1.250000e+00 : f32
    %160 = vector.broadcast %cst_58 : f32 to vector<8x128xf32>
    %161 = arith.mulf %159, %160 : vector<8x128xf32>
    %cst_59 = arith.constant 1.400000e+00 : f32
    %162 = vector.broadcast %cst_59 : f32 to vector<8x128xf32>
    %163 = arith.subf %5, %162 : vector<8x128xf32>
    %cst_60 = arith.constant 1.250000e+00 : f32
    %164 = vector.broadcast %cst_60 : f32 to vector<8x128xf32>
    %165 = arith.mulf %163, %164 : vector<8x128xf32>
    %cst_61 = arith.constant 1.800000e+00 : f32
    %166 = vector.broadcast %cst_61 : f32 to vector<8x128xf32>
    %167 = arith.subf %5, %166 : vector<8x128xf32>
    %cst_62 = arith.constant 1.250000e+00 : f32
    %168 = vector.broadcast %cst_62 : f32 to vector<8x128xf32>
    %169 = arith.mulf %167, %168 : vector<8x128xf32>
    %170 = arith.mulf %141, %102 : vector<8x128xf32>
    %cst_63 = arith.constant 1.000000e+00 : f32
    %171 = vector.broadcast %cst_63 : f32 to vector<8x128xf32>
    %172 = arith.subf %171, %145 : vector<8x128xf32>
    %173 = arith.mulf %172, %107 : vector<8x128xf32>
    %174 = arith.addf %170, %173 : vector<8x128xf32>
    %175 = arith.mulf %145, %107 : vector<8x128xf32>
    %cst_64 = arith.constant 1.000000e+00 : f32
    %176 = vector.broadcast %cst_64 : f32 to vector<8x128xf32>
    %177 = arith.subf %176, %149 : vector<8x128xf32>
    %178 = arith.mulf %177, %112 : vector<8x128xf32>
    %179 = arith.addf %175, %178 : vector<8x128xf32>
    %180 = arith.mulf %149, %112 : vector<8x128xf32>
    %cst_65 = arith.constant 1.000000e+00 : f32
    %181 = vector.broadcast %cst_65 : f32 to vector<8x128xf32>
    %182 = arith.subf %181, %153 : vector<8x128xf32>
    %183 = arith.mulf %182, %117 : vector<8x128xf32>
    %184 = arith.addf %180, %183 : vector<8x128xf32>
    %185 = arith.mulf %153, %117 : vector<8x128xf32>
    %cst_66 = arith.constant 1.000000e+00 : f32
    %186 = vector.broadcast %cst_66 : f32 to vector<8x128xf32>
    %187 = arith.subf %186, %157 : vector<8x128xf32>
    %188 = arith.mulf %187, %122 : vector<8x128xf32>
    %189 = arith.addf %185, %188 : vector<8x128xf32>
    %190 = arith.mulf %157, %122 : vector<8x128xf32>
    %cst_67 = arith.constant 1.000000e+00 : f32
    %191 = vector.broadcast %cst_67 : f32 to vector<8x128xf32>
    %192 = arith.subf %191, %161 : vector<8x128xf32>
    %193 = arith.mulf %192, %127 : vector<8x128xf32>
    %194 = arith.addf %190, %193 : vector<8x128xf32>
    %195 = arith.mulf %161, %127 : vector<8x128xf32>
    %cst_68 = arith.constant 1.000000e+00 : f32
    %196 = vector.broadcast %cst_68 : f32 to vector<8x128xf32>
    %197 = arith.subf %196, %165 : vector<8x128xf32>
    %198 = arith.mulf %197, %132 : vector<8x128xf32>
    %199 = arith.addf %195, %198 : vector<8x128xf32>
    %200 = arith.mulf %165, %132 : vector<8x128xf32>
    %cst_69 = arith.constant 1.000000e+00 : f32
    %201 = vector.broadcast %cst_69 : f32 to vector<8x128xf32>
    %202 = arith.subf %201, %169 : vector<8x128xf32>
    %203 = arith.mulf %202, %137 : vector<8x128xf32>
    %204 = arith.addf %200, %203 : vector<8x128xf32>
    %cst_70 = arith.constant -1.000000e+00 : f32
    %205 = vector.broadcast %cst_70 : f32 to vector<8x128xf32>
    %206 = arith.subf %5, %205 : vector<8x128xf32>
    %cst_71 = arith.constant 0.833333313 : f32
    %207 = vector.broadcast %cst_71 : f32 to vector<8x128xf32>
    %208 = arith.mulf %206, %207 : vector<8x128xf32>
    %cst_72 = arith.constant -6.000000e-01 : f32
    %209 = vector.broadcast %cst_72 : f32 to vector<8x128xf32>
    %210 = arith.subf %5, %209 : vector<8x128xf32>
    %cst_73 = arith.constant 0.833333313 : f32
    %211 = vector.broadcast %cst_73 : f32 to vector<8x128xf32>
    %212 = arith.mulf %210, %211 : vector<8x128xf32>
    %cst_74 = arith.constant -2.000000e-01 : f32
    %213 = vector.broadcast %cst_74 : f32 to vector<8x128xf32>
    %214 = arith.subf %5, %213 : vector<8x128xf32>
    %cst_75 = arith.constant 0.833333313 : f32
    %215 = vector.broadcast %cst_75 : f32 to vector<8x128xf32>
    %216 = arith.mulf %214, %215 : vector<8x128xf32>
    %cst_76 = arith.constant 2.000000e-01 : f32
    %217 = vector.broadcast %cst_76 : f32 to vector<8x128xf32>
    %218 = arith.subf %5, %217 : vector<8x128xf32>
    %cst_77 = arith.constant 0.833333313 : f32
    %219 = vector.broadcast %cst_77 : f32 to vector<8x128xf32>
    %220 = arith.mulf %218, %219 : vector<8x128xf32>
    %cst_78 = arith.constant 6.000000e-01 : f32
    %221 = vector.broadcast %cst_78 : f32 to vector<8x128xf32>
    %222 = arith.subf %5, %221 : vector<8x128xf32>
    %cst_79 = arith.constant 0.833333313 : f32
    %223 = vector.broadcast %cst_79 : f32 to vector<8x128xf32>
    %224 = arith.mulf %222, %223 : vector<8x128xf32>
    %cst_80 = arith.constant 1.000000e+00 : f32
    %225 = vector.broadcast %cst_80 : f32 to vector<8x128xf32>
    %226 = arith.subf %5, %225 : vector<8x128xf32>
    %cst_81 = arith.constant 0.833333313 : f32
    %227 = vector.broadcast %cst_81 : f32 to vector<8x128xf32>
    %228 = arith.mulf %226, %227 : vector<8x128xf32>
    %cst_82 = arith.constant 1.400000e+00 : f32
    %229 = vector.broadcast %cst_82 : f32 to vector<8x128xf32>
    %230 = arith.subf %5, %229 : vector<8x128xf32>
    %cst_83 = arith.constant 0.833333313 : f32
    %231 = vector.broadcast %cst_83 : f32 to vector<8x128xf32>
    %232 = arith.mulf %230, %231 : vector<8x128xf32>
    %233 = arith.mulf %208, %174 : vector<8x128xf32>
    %cst_84 = arith.constant 1.000000e+00 : f32
    %234 = vector.broadcast %cst_84 : f32 to vector<8x128xf32>
    %235 = arith.subf %234, %212 : vector<8x128xf32>
    %236 = arith.mulf %235, %179 : vector<8x128xf32>
    %237 = arith.addf %233, %236 : vector<8x128xf32>
    %238 = arith.mulf %212, %179 : vector<8x128xf32>
    %cst_85 = arith.constant 1.000000e+00 : f32
    %239 = vector.broadcast %cst_85 : f32 to vector<8x128xf32>
    %240 = arith.subf %239, %216 : vector<8x128xf32>
    %241 = arith.mulf %240, %184 : vector<8x128xf32>
    %242 = arith.addf %238, %241 : vector<8x128xf32>
    %243 = arith.mulf %216, %184 : vector<8x128xf32>
    %cst_86 = arith.constant 1.000000e+00 : f32
    %244 = vector.broadcast %cst_86 : f32 to vector<8x128xf32>
    %245 = arith.subf %244, %220 : vector<8x128xf32>
    %246 = arith.mulf %245, %189 : vector<8x128xf32>
    %247 = arith.addf %243, %246 : vector<8x128xf32>
    %248 = arith.mulf %220, %189 : vector<8x128xf32>
    %cst_87 = arith.constant 1.000000e+00 : f32
    %249 = vector.broadcast %cst_87 : f32 to vector<8x128xf32>
    %250 = arith.subf %249, %224 : vector<8x128xf32>
    %251 = arith.mulf %250, %194 : vector<8x128xf32>
    %252 = arith.addf %248, %251 : vector<8x128xf32>
    %253 = arith.mulf %224, %194 : vector<8x128xf32>
    %cst_88 = arith.constant 1.000000e+00 : f32
    %254 = vector.broadcast %cst_88 : f32 to vector<8x128xf32>
    %255 = arith.subf %254, %228 : vector<8x128xf32>
    %256 = arith.mulf %255, %199 : vector<8x128xf32>
    %257 = arith.addf %253, %256 : vector<8x128xf32>
    %258 = arith.mulf %228, %199 : vector<8x128xf32>
    %cst_89 = arith.constant 1.000000e+00 : f32
    %259 = vector.broadcast %cst_89 : f32 to vector<8x128xf32>
    %260 = arith.subf %259, %232 : vector<8x128xf32>
    %261 = arith.mulf %260, %204 : vector<8x128xf32>
    %262 = arith.addf %258, %261 : vector<8x128xf32>
    %263 = tpu.concatenate %237, %242, %247, %252, %257, %262 in 0 : vector<8x128xf32>, vector<8x128xf32>, vector<8x128xf32>, vector<8x128xf32>, vector<8x128xf32>, vector<8x128xf32> -> vector<48x128xf32>
    %c0_90 = arith.constant 0 : index
    %c0_91 = arith.constant 0 : index
    %264 = vector.load %arg2[%c0_90, %c0_91] : memref<8x48xf32, #tpu.memory_space<vmem>>, vector<8x48xf32>
    %cst_92 = arith.constant dense<0.000000e+00> : vector<8x128xf32>
    %265 = tpu.matmul %264, %263, %cst_92 {dimension_numbers = #tpu.dot_dimension_numbers<[1], [0], [0], [1], [0, 0, 1, 1], [], []>} : vector<8x48xf32>, vector<48x128xf32>, vector<8x128xf32> -> vector<8x128xf32>
    %266 = math.tanh %265 : vector<8x128xf32>
    %cst_93 = arith.constant 1.000000e+00 : f32
    %267 = vector.broadcast %cst_93 : f32 to vector<8x128xf32>
    %268 = arith.mulf %266, %267 : vector<8x128xf32>
    %cst_94 = arith.constant 0.000000e+00 : f32
    %269 = vector.broadcast %cst_94 : f32 to vector<8x128xf32>
    %270 = arith.addf %268, %269 : vector<8x128xf32>
    %cst_95 = arith.constant -1.000000e+00 : f32
    %271 = vector.broadcast %cst_95 : f32 to vector<8x128xf32>
    %272 = arith.cmpf oge, %270, %271 : vector<8x128xf32>
    %cst_96 = arith.constant -6.000000e-01 : f32
    %273 = vector.broadcast %cst_96 : f32 to vector<8x128xf32>
    %274 = arith.cmpf oge, %270, %273 : vector<8x128xf32>
    %cst_97 = arith.constant -2.000000e-01 : f32
    %275 = vector.broadcast %cst_97 : f32 to vector<8x128xf32>
    %276 = arith.cmpf oge, %270, %275 : vector<8x128xf32>
    %cst_98 = arith.constant 2.000000e-01 : f32
    %277 = vector.broadcast %cst_98 : f32 to vector<8x128xf32>
    %278 = arith.cmpf oge, %270, %277 : vector<8x128xf32>
    %cst_99 = arith.constant 6.000000e-01 : f32
    %279 = vector.broadcast %cst_99 : f32 to vector<8x128xf32>
    %280 = arith.cmpf oge, %270, %279 : vector<8x128xf32>
    %cst_100 = arith.constant 1.000000e+00 : f32
    %281 = vector.broadcast %cst_100 : f32 to vector<8x128xf32>
    %282 = arith.cmpf oge, %270, %281 : vector<8x128xf32>
    %cst_101 = arith.constant 1.400000e+00 : f32
    %283 = vector.broadcast %cst_101 : f32 to vector<8x128xf32>
    %284 = arith.cmpf oge, %270, %283 : vector<8x128xf32>
    %cst_102 = arith.constant 1.800000e+00 : f32
    %285 = vector.broadcast %cst_102 : f32 to vector<8x128xf32>
    %286 = arith.cmpf oge, %270, %285 : vector<8x128xf32>
    %cst_103 = arith.constant 2.200000e+00 : f32
    %287 = vector.broadcast %cst_103 : f32 to vector<8x128xf32>
    %288 = arith.cmpf oge, %270, %287 : vector<8x128xf32>
    %cst_104 = arith.constant 2.600000e+00 : f32
    %289 = vector.broadcast %cst_104 : f32 to vector<8x128xf32>
    %290 = arith.cmpf oge, %270, %289 : vector<8x128xf32>
    %cst_105 = arith.constant dense<true> : vector<8x128xi1>
    %291 = arith.xori %274, %cst_105 : vector<8x128xi1>
    %292 = arith.andi %272, %291 : vector<8x128xi1>
    %293 = arith.extui %292 : vector<8x128xi1> to vector<8x128xi32>
    %294 = arith.sitofp %293 : vector<8x128xi32> to vector<8x128xf32>
    %cst_106 = arith.constant dense<true> : vector<8x128xi1>
    %295 = arith.xori %276, %cst_106 : vector<8x128xi1>
    %296 = arith.andi %274, %295 : vector<8x128xi1>
    %297 = arith.extui %296 : vector<8x128xi1> to vector<8x128xi32>
    %298 = arith.sitofp %297 : vector<8x128xi32> to vector<8x128xf32>
    %cst_107 = arith.constant dense<true> : vector<8x128xi1>
    %299 = arith.xori %278, %cst_107 : vector<8x128xi1>
    %300 = arith.andi %276, %299 : vector<8x128xi1>
    %301 = arith.extui %300 : vector<8x128xi1> to vector<8x128xi32>
    %302 = arith.sitofp %301 : vector<8x128xi32> to vector<8x128xf32>
    %cst_108 = arith.constant dense<true> : vector<8x128xi1>
    %303 = arith.xori %280, %cst_108 : vector<8x128xi1>
    %304 = arith.andi %278, %303 : vector<8x128xi1>
    %305 = arith.extui %304 : vector<8x128xi1> to vector<8x128xi32>
    %306 = arith.sitofp %305 : vector<8x128xi32> to vector<8x128xf32>
    %cst_109 = arith.constant dense<true> : vector<8x128xi1>
    %307 = arith.xori %282, %cst_109 : vector<8x128xi1>
    %308 = arith.andi %280, %307 : vector<8x128xi1>
    %309 = arith.extui %308 : vector<8x128xi1> to vector<8x128xi32>
    %310 = arith.sitofp %309 : vector<8x128xi32> to vector<8x128xf32>
    %cst_110 = arith.constant dense<true> : vector<8x128xi1>
    %311 = arith.xori %284, %cst_110 : vector<8x128xi1>
    %312 = arith.andi %282, %311 : vector<8x128xi1>
    %313 = arith.extui %312 : vector<8x128xi1> to vector<8x128xi32>
    %314 = arith.sitofp %313 : vector<8x128xi32> to vector<8x128xf32>
    %cst_111 = arith.constant dense<true> : vector<8x128xi1>
    %315 = arith.xori %286, %cst_111 : vector<8x128xi1>
    %316 = arith.andi %284, %315 : vector<8x128xi1>
    %317 = arith.extui %316 : vector<8x128xi1> to vector<8x128xi32>
    %318 = arith.sitofp %317 : vector<8x128xi32> to vector<8x128xf32>
    %cst_112 = arith.constant dense<true> : vector<8x128xi1>
    %319 = arith.xori %288, %cst_112 : vector<8x128xi1>
    %320 = arith.andi %286, %319 : vector<8x128xi1>
    %321 = arith.extui %320 : vector<8x128xi1> to vector<8x128xi32>
    %322 = arith.sitofp %321 : vector<8x128xi32> to vector<8x128xf32>
    %cst_113 = arith.constant dense<true> : vector<8x128xi1>
    %323 = arith.xori %290, %cst_113 : vector<8x128xi1>
    %324 = arith.andi %288, %323 : vector<8x128xi1>
    %325 = arith.extui %324 : vector<8x128xi1> to vector<8x128xi32>
    %326 = arith.sitofp %325 : vector<8x128xi32> to vector<8x128xf32>
    %cst_114 = arith.constant -1.000000e+00 : f32
    %327 = vector.broadcast %cst_114 : f32 to vector<8x128xf32>
    %328 = arith.subf %270, %327 : vector<8x128xf32>
    %cst_115 = arith.constant 2.500000e+00 : f32
    %329 = vector.broadcast %cst_115 : f32 to vector<8x128xf32>
    %330 = arith.mulf %328, %329 : vector<8x128xf32>
    %cst_116 = arith.constant -6.000000e-01 : f32
    %331 = vector.broadcast %cst_116 : f32 to vector<8x128xf32>
    %332 = arith.subf %270, %331 : vector<8x128xf32>
    %cst_117 = arith.constant 2.500000e+00 : f32
    %333 = vector.broadcast %cst_117 : f32 to vector<8x128xf32>
    %334 = arith.mulf %332, %333 : vector<8x128xf32>
    %cst_118 = arith.constant -2.000000e-01 : f32
    %335 = vector.broadcast %cst_118 : f32 to vector<8x128xf32>
    %336 = arith.subf %270, %335 : vector<8x128xf32>
    %cst_119 = arith.constant 2.500000e+00 : f32
    %337 = vector.broadcast %cst_119 : f32 to vector<8x128xf32>
    %338 = arith.mulf %336, %337 : vector<8x128xf32>
    %cst_120 = arith.constant 2.000000e-01 : f32
    %339 = vector.broadcast %cst_120 : f32 to vector<8x128xf32>
    %340 = arith.subf %270, %339 : vector<8x128xf32>
    %cst_121 = arith.constant 2.500000e+00 : f32
    %341 = vector.broadcast %cst_121 : f32 to vector<8x128xf32>
    %342 = arith.mulf %340, %341 : vector<8x128xf32>
    %cst_122 = arith.constant 6.000000e-01 : f32
    %343 = vector.broadcast %cst_122 : f32 to vector<8x128xf32>
    %344 = arith.subf %270, %343 : vector<8x128xf32>
    %cst_123 = arith.constant 2.500000e+00 : f32
    %345 = vector.broadcast %cst_123 : f32 to vector<8x128xf32>
    %346 = arith.mulf %344, %345 : vector<8x128xf32>
    %cst_124 = arith.constant 1.000000e+00 : f32
    %347 = vector.broadcast %cst_124 : f32 to vector<8x128xf32>
    %348 = arith.subf %270, %347 : vector<8x128xf32>
    %cst_125 = arith.constant 2.500000e+00 : f32
    %349 = vector.broadcast %cst_125 : f32 to vector<8x128xf32>
    %350 = arith.mulf %348, %349 : vector<8x128xf32>
    %cst_126 = arith.constant 1.400000e+00 : f32
    %351 = vector.broadcast %cst_126 : f32 to vector<8x128xf32>
    %352 = arith.subf %270, %351 : vector<8x128xf32>
    %cst_127 = arith.constant 2.500000e+00 : f32
    %353 = vector.broadcast %cst_127 : f32 to vector<8x128xf32>
    %354 = arith.mulf %352, %353 : vector<8x128xf32>
    %cst_128 = arith.constant 1.800000e+00 : f32
    %355 = vector.broadcast %cst_128 : f32 to vector<8x128xf32>
    %356 = arith.subf %270, %355 : vector<8x128xf32>
    %cst_129 = arith.constant 2.500000e+00 : f32
    %357 = vector.broadcast %cst_129 : f32 to vector<8x128xf32>
    %358 = arith.mulf %356, %357 : vector<8x128xf32>
    %cst_130 = arith.constant 2.200000e+00 : f32
    %359 = vector.broadcast %cst_130 : f32 to vector<8x128xf32>
    %360 = arith.subf %270, %359 : vector<8x128xf32>
    %cst_131 = arith.constant 2.500000e+00 : f32
    %361 = vector.broadcast %cst_131 : f32 to vector<8x128xf32>
    %362 = arith.mulf %360, %361 : vector<8x128xf32>
    %363 = arith.mulf %330, %294 : vector<8x128xf32>
    %cst_132 = arith.constant 1.000000e+00 : f32
    %364 = vector.broadcast %cst_132 : f32 to vector<8x128xf32>
    %365 = arith.subf %364, %334 : vector<8x128xf32>
    %366 = arith.mulf %365, %298 : vector<8x128xf32>
    %367 = arith.addf %363, %366 : vector<8x128xf32>
    %368 = arith.mulf %334, %298 : vector<8x128xf32>
    %cst_133 = arith.constant 1.000000e+00 : f32
    %369 = vector.broadcast %cst_133 : f32 to vector<8x128xf32>
    %370 = arith.subf %369, %338 : vector<8x128xf32>
    %371 = arith.mulf %370, %302 : vector<8x128xf32>
    %372 = arith.addf %368, %371 : vector<8x128xf32>
    %373 = arith.mulf %338, %302 : vector<8x128xf32>
    %cst_134 = arith.constant 1.000000e+00 : f32
    %374 = vector.broadcast %cst_134 : f32 to vector<8x128xf32>
    %375 = arith.subf %374, %342 : vector<8x128xf32>
    %376 = arith.mulf %375, %306 : vector<8x128xf32>
    %377 = arith.addf %373, %376 : vector<8x128xf32>
    %378 = arith.mulf %342, %306 : vector<8x128xf32>
    %cst_135 = arith.constant 1.000000e+00 : f32
    %379 = vector.broadcast %cst_135 : f32 to vector<8x128xf32>
    %380 = arith.subf %379, %346 : vector<8x128xf32>
    %381 = arith.mulf %380, %310 : vector<8x128xf32>
    %382 = arith.addf %378, %381 : vector<8x128xf32>
    %383 = arith.mulf %346, %310 : vector<8x128xf32>
    %cst_136 = arith.constant 1.000000e+00 : f32
    %384 = vector.broadcast %cst_136 : f32 to vector<8x128xf32>
    %385 = arith.subf %384, %350 : vector<8x128xf32>
    %386 = arith.mulf %385, %314 : vector<8x128xf32>
    %387 = arith.addf %383, %386 : vector<8x128xf32>
    %388 = arith.mulf %350, %314 : vector<8x128xf32>
    %cst_137 = arith.constant 1.000000e+00 : f32
    %389 = vector.broadcast %cst_137 : f32 to vector<8x128xf32>
    %390 = arith.subf %389, %354 : vector<8x128xf32>
    %391 = arith.mulf %390, %318 : vector<8x128xf32>
    %392 = arith.addf %388, %391 : vector<8x128xf32>
    %393 = arith.mulf %354, %318 : vector<8x128xf32>
    %cst_138 = arith.constant 1.000000e+00 : f32
    %394 = vector.broadcast %cst_138 : f32 to vector<8x128xf32>
    %395 = arith.subf %394, %358 : vector<8x128xf32>
    %396 = arith.mulf %395, %322 : vector<8x128xf32>
    %397 = arith.addf %393, %396 : vector<8x128xf32>
    %398 = arith.mulf %358, %322 : vector<8x128xf32>
    %cst_139 = arith.constant 1.000000e+00 : f32
    %399 = vector.broadcast %cst_139 : f32 to vector<8x128xf32>
    %400 = arith.subf %399, %362 : vector<8x128xf32>
    %401 = arith.mulf %400, %326 : vector<8x128xf32>
    %402 = arith.addf %398, %401 : vector<8x128xf32>
    %cst_140 = arith.constant -1.000000e+00 : f32
    %403 = vector.broadcast %cst_140 : f32 to vector<8x128xf32>
    %404 = arith.subf %270, %403 : vector<8x128xf32>
    %cst_141 = arith.constant 1.250000e+00 : f32
    %405 = vector.broadcast %cst_141 : f32 to vector<8x128xf32>
    %406 = arith.mulf %404, %405 : vector<8x128xf32>
    %cst_142 = arith.constant -6.000000e-01 : f32
    %407 = vector.broadcast %cst_142 : f32 to vector<8x128xf32>
    %408 = arith.subf %270, %407 : vector<8x128xf32>
    %cst_143 = arith.constant 1.250000e+00 : f32
    %409 = vector.broadcast %cst_143 : f32 to vector<8x128xf32>
    %410 = arith.mulf %408, %409 : vector<8x128xf32>
    %cst_144 = arith.constant -2.000000e-01 : f32
    %411 = vector.broadcast %cst_144 : f32 to vector<8x128xf32>
    %412 = arith.subf %270, %411 : vector<8x128xf32>
    %cst_145 = arith.constant 1.250000e+00 : f32
    %413 = vector.broadcast %cst_145 : f32 to vector<8x128xf32>
    %414 = arith.mulf %412, %413 : vector<8x128xf32>
    %cst_146 = arith.constant 2.000000e-01 : f32
    %415 = vector.broadcast %cst_146 : f32 to vector<8x128xf32>
    %416 = arith.subf %270, %415 : vector<8x128xf32>
    %cst_147 = arith.constant 1.250000e+00 : f32
    %417 = vector.broadcast %cst_147 : f32 to vector<8x128xf32>
    %418 = arith.mulf %416, %417 : vector<8x128xf32>
    %cst_148 = arith.constant 6.000000e-01 : f32
    %419 = vector.broadcast %cst_148 : f32 to vector<8x128xf32>
    %420 = arith.subf %270, %419 : vector<8x128xf32>
    %cst_149 = arith.constant 1.250000e+00 : f32
    %421 = vector.broadcast %cst_149 : f32 to vector<8x128xf32>
    %422 = arith.mulf %420, %421 : vector<8x128xf32>
    %cst_150 = arith.constant 1.000000e+00 : f32
    %423 = vector.broadcast %cst_150 : f32 to vector<8x128xf32>
    %424 = arith.subf %270, %423 : vector<8x128xf32>
    %cst_151 = arith.constant 1.250000e+00 : f32
    %425 = vector.broadcast %cst_151 : f32 to vector<8x128xf32>
    %426 = arith.mulf %424, %425 : vector<8x128xf32>
    %cst_152 = arith.constant 1.400000e+00 : f32
    %427 = vector.broadcast %cst_152 : f32 to vector<8x128xf32>
    %428 = arith.subf %270, %427 : vector<8x128xf32>
    %cst_153 = arith.constant 1.250000e+00 : f32
    %429 = vector.broadcast %cst_153 : f32 to vector<8x128xf32>
    %430 = arith.mulf %428, %429 : vector<8x128xf32>
    %cst_154 = arith.constant 1.800000e+00 : f32
    %431 = vector.broadcast %cst_154 : f32 to vector<8x128xf32>
    %432 = arith.subf %270, %431 : vector<8x128xf32>
    %cst_155 = arith.constant 1.250000e+00 : f32
    %433 = vector.broadcast %cst_155 : f32 to vector<8x128xf32>
    %434 = arith.mulf %432, %433 : vector<8x128xf32>
    %435 = arith.mulf %406, %367 : vector<8x128xf32>
    %cst_156 = arith.constant 1.000000e+00 : f32
    %436 = vector.broadcast %cst_156 : f32 to vector<8x128xf32>
    %437 = arith.subf %436, %410 : vector<8x128xf32>
    %438 = arith.mulf %437, %372 : vector<8x128xf32>
    %439 = arith.addf %435, %438 : vector<8x128xf32>
    %440 = arith.mulf %410, %372 : vector<8x128xf32>
    %cst_157 = arith.constant 1.000000e+00 : f32
    %441 = vector.broadcast %cst_157 : f32 to vector<8x128xf32>
    %442 = arith.subf %441, %414 : vector<8x128xf32>
    %443 = arith.mulf %442, %377 : vector<8x128xf32>
    %444 = arith.addf %440, %443 : vector<8x128xf32>
    %445 = arith.mulf %414, %377 : vector<8x128xf32>
    %cst_158 = arith.constant 1.000000e+00 : f32
    %446 = vector.broadcast %cst_158 : f32 to vector<8x128xf32>
    %447 = arith.subf %446, %418 : vector<8x128xf32>
    %448 = arith.mulf %447, %382 : vector<8x128xf32>
    %449 = arith.addf %445, %448 : vector<8x128xf32>
    %450 = arith.mulf %418, %382 : vector<8x128xf32>
    %cst_159 = arith.constant 1.000000e+00 : f32
    %451 = vector.broadcast %cst_159 : f32 to vector<8x128xf32>
    %452 = arith.subf %451, %422 : vector<8x128xf32>
    %453 = arith.mulf %452, %387 : vector<8x128xf32>
    %454 = arith.addf %450, %453 : vector<8x128xf32>
    %455 = arith.mulf %422, %387 : vector<8x128xf32>
    %cst_160 = arith.constant 1.000000e+00 : f32
    %456 = vector.broadcast %cst_160 : f32 to vector<8x128xf32>
    %457 = arith.subf %456, %426 : vector<8x128xf32>
    %458 = arith.mulf %457, %392 : vector<8x128xf32>
    %459 = arith.addf %455, %458 : vector<8x128xf32>
    %460 = arith.mulf %426, %392 : vector<8x128xf32>
    %cst_161 = arith.constant 1.000000e+00 : f32
    %461 = vector.broadcast %cst_161 : f32 to vector<8x128xf32>
    %462 = arith.subf %461, %430 : vector<8x128xf32>
    %463 = arith.mulf %462, %397 : vector<8x128xf32>
    %464 = arith.addf %460, %463 : vector<8x128xf32>
    %465 = arith.mulf %430, %397 : vector<8x128xf32>
    %cst_162 = arith.constant 1.000000e+00 : f32
    %466 = vector.broadcast %cst_162 : f32 to vector<8x128xf32>
    %467 = arith.subf %466, %434 : vector<8x128xf32>
    %468 = arith.mulf %467, %402 : vector<8x128xf32>
    %469 = arith.addf %465, %468 : vector<8x128xf32>
    %cst_163 = arith.constant -1.000000e+00 : f32
    %470 = vector.broadcast %cst_163 : f32 to vector<8x128xf32>
    %471 = arith.subf %270, %470 : vector<8x128xf32>
    %cst_164 = arith.constant 0.833333313 : f32
    %472 = vector.broadcast %cst_164 : f32 to vector<8x128xf32>
    %473 = arith.mulf %471, %472 : vector<8x128xf32>
    %cst_165 = arith.constant -6.000000e-01 : f32
    %474 = vector.broadcast %cst_165 : f32 to vector<8x128xf32>
    %475 = arith.subf %270, %474 : vector<8x128xf32>
    %cst_166 = arith.constant 0.833333313 : f32
    %476 = vector.broadcast %cst_166 : f32 to vector<8x128xf32>
    %477 = arith.mulf %475, %476 : vector<8x128xf32>
    %cst_167 = arith.constant -2.000000e-01 : f32
    %478 = vector.broadcast %cst_167 : f32 to vector<8x128xf32>
    %479 = arith.subf %270, %478 : vector<8x128xf32>
    %cst_168 = arith.constant 0.833333313 : f32
    %480 = vector.broadcast %cst_168 : f32 to vector<8x128xf32>
    %481 = arith.mulf %479, %480 : vector<8x128xf32>
    %cst_169 = arith.constant 2.000000e-01 : f32
    %482 = vector.broadcast %cst_169 : f32 to vector<8x128xf32>
    %483 = arith.subf %270, %482 : vector<8x128xf32>
    %cst_170 = arith.constant 0.833333313 : f32
    %484 = vector.broadcast %cst_170 : f32 to vector<8x128xf32>
    %485 = arith.mulf %483, %484 : vector<8x128xf32>
    %cst_171 = arith.constant 6.000000e-01 : f32
    %486 = vector.broadcast %cst_171 : f32 to vector<8x128xf32>
    %487 = arith.subf %270, %486 : vector<8x128xf32>
    %cst_172 = arith.constant 0.833333313 : f32
    %488 = vector.broadcast %cst_172 : f32 to vector<8x128xf32>
    %489 = arith.mulf %487, %488 : vector<8x128xf32>
    %cst_173 = arith.constant 1.000000e+00 : f32
    %490 = vector.broadcast %cst_173 : f32 to vector<8x128xf32>
    %491 = arith.subf %270, %490 : vector<8x128xf32>
    %cst_174 = arith.constant 0.833333313 : f32
    %492 = vector.broadcast %cst_174 : f32 to vector<8x128xf32>
    %493 = arith.mulf %491, %492 : vector<8x128xf32>
    %cst_175 = arith.constant 1.400000e+00 : f32
    %494 = vector.broadcast %cst_175 : f32 to vector<8x128xf32>
    %495 = arith.subf %270, %494 : vector<8x128xf32>
    %cst_176 = arith.constant 0.833333313 : f32
    %496 = vector.broadcast %cst_176 : f32 to vector<8x128xf32>
    %497 = arith.mulf %495, %496 : vector<8x128xf32>
    %498 = arith.mulf %473, %439 : vector<8x128xf32>
    %cst_177 = arith.constant 1.000000e+00 : f32
    %499 = vector.broadcast %cst_177 : f32 to vector<8x128xf32>
    %500 = arith.subf %499, %477 : vector<8x128xf32>
    %501 = arith.mulf %500, %444 : vector<8x128xf32>
    %502 = arith.addf %498, %501 : vector<8x128xf32>
    %503 = arith.mulf %477, %444 : vector<8x128xf32>
    %cst_178 = arith.constant 1.000000e+00 : f32
    %504 = vector.broadcast %cst_178 : f32 to vector<8x128xf32>
    %505 = arith.subf %504, %481 : vector<8x128xf32>
    %506 = arith.mulf %505, %449 : vector<8x128xf32>
    %507 = arith.addf %503, %506 : vector<8x128xf32>
    %508 = arith.mulf %481, %449 : vector<8x128xf32>
    %cst_179 = arith.constant 1.000000e+00 : f32
    %509 = vector.broadcast %cst_179 : f32 to vector<8x128xf32>
    %510 = arith.subf %509, %485 : vector<8x128xf32>
    %511 = arith.mulf %510, %454 : vector<8x128xf32>
    %512 = arith.addf %508, %511 : vector<8x128xf32>
    %513 = arith.mulf %485, %454 : vector<8x128xf32>
    %cst_180 = arith.constant 1.000000e+00 : f32
    %514 = vector.broadcast %cst_180 : f32 to vector<8x128xf32>
    %515 = arith.subf %514, %489 : vector<8x128xf32>
    %516 = arith.mulf %515, %459 : vector<8x128xf32>
    %517 = arith.addf %513, %516 : vector<8x128xf32>
    %518 = arith.mulf %489, %459 : vector<8x128xf32>
    %cst_181 = arith.constant 1.000000e+00 : f32
    %519 = vector.broadcast %cst_181 : f32 to vector<8x128xf32>
    %520 = arith.subf %519, %493 : vector<8x128xf32>
    %521 = arith.mulf %520, %464 : vector<8x128xf32>
    %522 = arith.addf %518, %521 : vector<8x128xf32>
    %523 = arith.mulf %493, %464 : vector<8x128xf32>
    %cst_182 = arith.constant 1.000000e+00 : f32
    %524 = vector.broadcast %cst_182 : f32 to vector<8x128xf32>
    %525 = arith.subf %524, %497 : vector<8x128xf32>
    %526 = arith.mulf %525, %469 : vector<8x128xf32>
    %527 = arith.addf %523, %526 : vector<8x128xf32>
    %528 = tpu.concatenate %502, %507, %512, %517, %522, %527 in 0 : vector<8x128xf32>, vector<8x128xf32>, vector<8x128xf32>, vector<8x128xf32>, vector<8x128xf32>, vector<8x128xf32> -> vector<48x128xf32>
    %c0_183 = arith.constant 0 : index
    %c0_184 = arith.constant 0 : index
    %529 = vector.load %arg3[%c0_183, %c0_184] : memref<8x48xf32, #tpu.memory_space<vmem>>, vector<8x48xf32>
    %cst_185 = arith.constant dense<0.000000e+00> : vector<8x128xf32>
    %530 = tpu.matmul %529, %528, %cst_185 {dimension_numbers = #tpu.dot_dimension_numbers<[1], [0], [0], [1], [0, 0, 1, 1], [], []>} : vector<8x48xf32>, vector<48x128xf32>, vector<8x128xf32> -> vector<8x128xf32>
    %c0_186 = arith.constant 0 : index
    %c0_187 = arith.constant 0 : index
    %531 = vector.load %arg4[%c0_186, %c0_187] : memref<8x128xf32, #tpu.memory_space<vmem>>, vector<8x128xf32>
    tpu.vector_store %arg4[%c0_186, %c0_187], %530 {strides = array<i32>} : memref<8x128xf32, #tpu.memory_space<vmem>>, vector<8x128xf32>,
    return
  }
  func.func @transform_0(%arg0: i32) -> (i32, i32) {
    %c0_i32 = arith.constant 0 : i32
    %c0_i32_0 = arith.constant 0 : i32
    return %c0_i32, %arg0 : i32, i32
  }
  func.func @transform_1(%arg0: i32) -> (i32, i32) {
    %c0_i32 = arith.constant 0 : i32
    %c0_i32_0 = arith.constant 0 : i32
    %c0_i32_1 = arith.constant 0 : i32
    return %c0_i32, %c0_i32_0 : i32, i32
  }
  func.func @transform_2(%arg0: i32) -> (i32, i32) {
    %c0_i32 = arith.constant 0 : i32
    %c0_i32_0 = arith.constant 0 : i32
    %c0_i32_1 = arith.constant 0 : i32
    return %c0_i32, %c0_i32_0 : i32, i32
  }
  func.func @transform_3(%arg0: i32) -> (i32, i32) {
    %c0_i32 = arith.constant 0 : i32
    %c0_i32_0 = arith.constant 0 : i32
    return %c0_i32, %arg0 : i32, i32
  }
}

</mosaic_0001>

<llo_original>
// kernel: tpu_custom_call.1
$region0: #{tpu_custom_call.1}
  #allocation0 [shape = 'u32[]', space=smem, size = 0x4, offset = 0x4, fixed_abs, tag = 'smem constant byte address 0x4 - core index']
  #allocation1 [shape = 'u32[144,128]{1,0:T(1,128)}', space=vmem, size = 0x12000, scoped, tag = 'internal scratch']
  %s0 = inlined_call_operand.hbm [shape: f32[8,128], index: 0, kind: input, shape index: {}]
  %s1 = inlined_call_operand.hbm [shape: f32[8,48], index: 1, kind: input, shape index: {}]
  %s2 = inlined_call_operand.hbm [shape: f32[8,48], index: 2, kind: input, shape index: {}]
  %s3 = inlined_call_operand.hbm [shape: f32[8,128], index: 3, kind: output, shape index: {}]
  %s4 = sld [smem:[#allocation0]]
  $region34: #{tpu_custom_call.1} parent=0
    _
  %s6 = ssub.s32 1, %s4
  %s7 = scalar_select 0, %s6, %s4
  $region1: #{tpu_custom_call.1} parent=0
    #allocation2 [shape = 'u8[4096]{0}', space=vmem, size = 0x1000, scoped, tag = 'input window, operand 0, single buffered']
    #allocation3 [shape = 's32[1]{0}', space=sflag, size = 0x4, scoped, tag = 'scoped memory for tpu_custom_call.1']
    #allocation4 [shape = 's32[1]{0}', space=sflag, size = 0x4, scoped, tag = 'scoped memory for tpu_custom_call.1']
    #allocation5 [shape = 'u8[4096]{0}', space=vmem, size = 0x1000, scoped, tag = 'input window, operand 1, single buffered']
    #allocation6 [shape = 's32[1]{0}', space=sflag, size = 0x4, scoped, tag = 'scoped memory for tpu_custom_call.1']
    #allocation7 [shape = 'u8[4096]{0}', space=vmem, size = 0x1000, scoped, tag = 'input window, operand 2, single buffered']
    #allocation8 [shape = 'u8[4096]{0}', space=vmem, size = 0x1000, scoped, tag = 'output window, operand 0, single buffered']
    %8 = vsyncpa [#allocation3], 0
    %9 = vsyncpa [#allocation6], 0
    %10 = vsyncpa [#allocation4], 0
    // Predicated region
    $region2: #{tpu_custom_call.1} parent=1 // pred_check
      _
    $region3: #{tpu_custom_call.1} parent=1 // pred_check_branch
      %12 = sbr.rel (0) target = $region5
    $region4: #{tpu_custom_call.1} parent=1 // pred_region
      %s14 = ssub.s32 128, 128
      %15 = vsyncadd [#allocation3], %s14
      %s17 = sshll.u32 [#allocation2], 4
      %s18 = int_to_ptr.vmem [resolvable:$true] %s17
      %20 = dma.hbm_to_vmem [thread:$0]  %s0, 128, %s18, [#allocation3]
    $region5: #{tpu_custom_call.1} parent=1 // pred_fallthru
      _
    // Predicated region
    $region6: #{tpu_custom_call.1} parent=1 // pred_check
      _
    $region7: #{tpu_custom_call.1} parent=1 // pred_check_branch
      %22 = sbr.rel (0) target = $region9
    $region8: #{tpu_custom_call.1} parent=1 // pred_region
      %s24 = ssub.s32 128, 128
      %25 = vsyncadd [#allocation6], %s24
      %s27 = sshll.u32 [#allocation5], 4
      %s28 = int_to_ptr.vmem [resolvable:$true] %s27
      %30 = dma.hbm_to_vmem [thread:$0]  %s1, 128, %s28, [#allocation6]
    $region9: #{tpu_custom_call.1} parent=1 // pred_fallthru
      _
    // Predicated region
    $region10: #{tpu_custom_call.1} parent=1 // pred_check
      _
    $region11: #{tpu_custom_call.1} parent=1 // pred_check_branch
      %32 = sbr.rel (0) target = $region13
    $region12: #{tpu_custom_call.1} parent=1 // pred_region
      %s34 = ssub.s32 128, 128
      %35 = vsyncadd [#allocation6], %s34
      %s37 = sshll.u32 [#allocation7], 4
      %s38 = int_to_ptr.vmem [resolvable:$true] %s37
      %40 = dma.hbm_to_vmem [thread:$0]  %s2, 128, %s38, [#allocation6]
    $region13: #{tpu_custom_call.1} parent=1 // pred_fallthru
      _
    // Predicated region
    $region14: #{tpu_custom_call.1} parent=1 // pred_check
      _
    $region15: #{tpu_custom_call.1} parent=1 // pred_check_branch
      %42 = sbr.rel (0) target = $region17
    $region16: #{tpu_custom_call.1} parent=1 // pred_region
      %43 = dma.done [#allocation3], 128
    $region17: #{tpu_custom_call.1} parent=1 // pred_fallthru
      _
    // Predicated region
    $region18: #{tpu_custom_call.1} parent=1 // pred_check
      _
    $region19: #{tpu_custom_call.1} parent=1 // pred_check_branch
      %45 = sbr.rel (0) target = $region21
    $region20: #{tpu_custom_call.1} parent=1 // pred_region
      %46 = dma.done [#allocation6], 128
    $region21: #{tpu_custom_call.1} parent=1 // pred_fallthru
      _
    // Predicated region
    $region22: #{tpu_custom_call.1} parent=1 // pred_check
      _
    $region23: #{tpu_custom_call.1} parent=1 // pred_check_branch
      %48 = sbr.rel (0) target = $region25
    $region24: #{tpu_custom_call.1} parent=1 // pred_region
      %49 = dma.done [#allocation6], 128
    $region25: #{tpu_custom_call.1} parent=1 // pred_fallthru
      _
    %v50 = vld [vmem:[#allocation2] sm:$0xff]
    %v51 = vtanh.pop %v50
    %v52 = vadd.f32 %v51, 0.0
    %vm53 = vcmp.ge.f32.partialorder %v52, -1.0
    %vm54 = vcmp.ge.f32.partialorder %v52, -0.6
    %vm55 = vcmp.ge.f32.partialorder %v52, -0.2
    %vm56 = vcmp.ge.f32.partialorder %v52, 0.2
    %vm57 = vcmp.ge.f32.partialorder %v52, 0.6
    %vm58 = vcmp.ge.f32.partialorder %v52, 1.0
    %vm59 = vcmp.ge.f32.partialorder %v52, 1.4
    %vm60 = vcmp.ge.f32.partialorder %v52, 1.8
    %vm61 = vcmp.ge.f32.partialorder %v52, 2.2
    %vm62 = vcmp.ge.f32.partialorder %v52, 2.6
    %vm63 = vmxor %vm54, 1
    %vm64 = vmand %vm53, %vm63
    %v65 = vsel %vm64, 1, 0
    %v66 = vcvt.s32.f32 %v65
    %vm67 = vmxor %vm55, 1
    %vm68 = vmand %vm54, %vm67
    %v69 = vsel %vm68, 1, 0
    %v70 = vcvt.s32.f32 %v69
    %vm71 = vmxor %vm56, 1
    %vm72 = vmand %vm55, %vm71
    %v73 = vsel %vm72, 1, 0
    %v74 = vcvt.s32.f32 %v73
    %vm75 = vmxor %vm57, 1
    %vm76 = vmand %vm56, %vm75
    %v77 = vsel %vm76, 1, 0
    %v78 = vcvt.s32.f32 %v77
    %vm79 = vmxor %vm58, 1
    %vm80 = vmand %vm57, %vm79
    %v81 = vsel %vm80, 1, 0
    %v82 = vcvt.s32.f32 %v81
    %vm83 = vmxor %vm59, 1
    %vm84 = vmand %vm58, %vm83
    %v85 = vsel %vm84, 1, 0
    %v86 = vcvt.s32.f32 %v85
    %vm87 = vmxor %vm60, 1
    %vm88 = vmand %vm59, %vm87
    %v89 = vsel %vm88, 1, 0
    %v90 = vcvt.s32.f32 %v89
    %vm91 = vmxor %vm61, 1
    %vm92 = vmand %vm60, %vm91
    %v93 = vsel %vm92, 1, 0
    %v94 = vcvt.s32.f32 %v93
    %vm95 = vmxor %vm62, 1
    %vm96 = vmand %vm61, %vm95
    %v97 = vsel %vm96, 1, 0
    %v98 = vcvt.s32.f32 %v97
    %v99 = vsub.f32 %v52, -1.0
    %v100 = vmul.f32 %v99, 2.5
    %v101 = vsub.f32 %v52, -0.6
    %v102 = vmul.f32 %v101, 2.5
    %v103 = vsub.f32 %v52, -0.2
    %v104 = vmul.f32 %v103, 2.5
    %v105 = vsub.f32 %v52, 0.2
    %v106 = vmul.f32 %v105, 2.5
    %v107 = vsub.f32 %v52, 0.6
    %v108 = vmul.f32 %v107, 2.5
    %v109 = vsub.f32 %v52, 1.0
    %v110 = vmul.f32 %v109, 2.5
    %v111 = vsub.f32 %v52, 1.4
    %v112 = vmul.f32 %v111, 2.5
    %v113 = vsub.f32 %v52, 1.8
    %v114 = vmul.f32 %v113, 2.5
    %v115 = vsub.f32 %v52, 2.2
    %v116 = vmul.f32 %v115, 2.5
    %v117 = vmul.f32 %v100, %v66
    %v118 = vsub.f32 1.0, %v102
    %v119 = vmul.f32 %v118, %v70
    %v120 = vadd.f32 %v117, %v119
    %v121 = vmul.f32 %v102, %v70
    %v122 = vsub.f32 1.0, %v104
    %v123 = vmul.f32 %v122, %v74
    %v124 = vadd.f32 %v121, %v123
    %v125 = vmul.f32 %v104, %v74
    %v126 = vsub.f32 1.0, %v106
    %v127 = vmul.f32 %v126, %v78
    %v128 = vadd.f32 %v125, %v127
    %v129 = vmul.f32 %v106, %v78
    %v130 = vsub.f32 1.0, %v108
    %v131 = vmul.f32 %v130, %v82
    %v132 = vadd.f32 %v129, %v131
    %v133 = vmul.f32 %v108, %v82
    %v134 = vsub.f32 1.0, %v110
    %v135 = vmul.f32 %v134, %v86
    %v136 = vadd.f32 %v133, %v135
    %v137 = vmul.f32 %v110, %v86
    %v138 = vsub.f32 1.0, %v112
    %v139 = vmul.f32 %v138, %v90
    %v140 = vadd.f32 %v137, %v139
    %v141 = vmul.f32 %v112, %v90
    %v142 = vsub.f32 1.0, %v114
    %v143 = vmul.f32 %v142, %v94
    %v144 = vadd.f32 %v141, %v143
    %v145 = vmul.f32 %v114, %v94
    %v146 = vsub.f32 1.0, %v116
    %v147 = vmul.f32 %v146, %v98
    %v148 = vadd.f32 %v145, %v147
    %v149 = vmul.f32 %v99, 1.25
    %v150 = vmul.f32 %v101, 1.25
    %v151 = vmul.f32 %v103, 1.25
    %v152 = vmul.f32 %v105, 1.25
    %v153 = vmul.f32 %v107, 1.25
    %v154 = vmul.f32 %v109, 1.25
    %v155 = vmul.f32 %v111, 1.25
    %v156 = vmul.f32 %v113, 1.25
    %v157 = vmul.f32 %v149, %v120
    %v158 = vsub.f32 1.0, %v150
    %v159 = vmul.f32 %v158, %v124
    %v160 = vadd.f32 %v157, %v159
    %v161 = vmul.f32 %v150, %v124
    %v162 = vsub.f32 1.0, %v151
    %v163 = vmul.f32 %v162, %v128
    %v164 = vadd.f32 %v161, %v163
    %v165 = vmul.f32 %v151, %v128
    %v166 = vsub.f32 1.0, %v152
    %v167 = vmul.f32 %v166, %v132
    %v168 = vadd.f32 %v165, %v167
    %v169 = vmul.f32 %v152, %v132
    %v170 = vsub.f32 1.0, %v153
    %v171 = vmul.f32 %v170, %v136
    %v172 = vadd.f32 %v169, %v171
    %v173 = vmul.f32 %v153, %v136
    %v174 = vsub.f32 1.0, %v154
    %v175 = vmul.f32 %v174, %v140
    %v176 = vadd.f32 %v173, %v175
    %v177 = vmul.f32 %v154, %v140
    %v178 = vsub.f32 1.0, %v155
    %v179 = vmul.f32 %v178, %v144
    %v180 = vadd.f32 %v177, %v179
    %v181 = vmul.f32 %v155, %v144
    %v182 = vsub.f32 1.0, %v156
    %v183 = vmul.f32 %v182, %v148
    %v184 = vadd.f32 %v181, %v183
    %v185 = vmul.f32 %v99, 0.8333333
    %v186 = vmul.f32 %v101, 0.8333333
    %v187 = vmul.f32 %v103, 0.8333333
    %v188 = vmul.f32 %v105, 0.8333333
    %v189 = vmul.f32 %v107, 0.8333333
    %v190 = vmul.f32 %v109, 0.8333333
    %v191 = vmul.f32 %v111, 0.8333333
    %v192 = vmul.f32 %v185, %v160
    %v193 = vsub.f32 1.0, %v186
    %v194 = vmul.f32 %v193, %v164
    %v195 = vadd.f32 %v192, %v194
    %v196 = vmul.f32 %v186, %v164
    %v197 = vsub.f32 1.0, %v187
    %v198 = vmul.f32 %v197, %v168
    %v199 = vadd.f32 %v196, %v198
    %v200 = vmul.f32 %v187, %v168
    %v201 = vsub.f32 1.0, %v188
    %v202 = vmul.f32 %v201, %v172
    %v203 = vadd.f32 %v200, %v202
    %v204 = vmul.f32 %v188, %v172
    %v205 = vsub.f32 1.0, %v189
    %v206 = vmul.f32 %v205, %v176
    %v207 = vadd.f32 %v204, %v206
    %v208 = vmul.f32 %v189, %v176
    %v209 = vsub.f32 1.0, %v190
    %v210 = vmul.f32 %v209, %v180
    %v211 = vadd.f32 %v208, %v210
    %v212 = vmul.f32 %v190, %v180
    %v213 = vsub.f32 1.0, %v191
    %v214 = vmul.f32 %v213, %v184
    %v215 = vadd.f32 %v212, %v214
    %v216 = vld [vmem:[#allocation5] sm:$0xff]
    %vm217 = vcmask 392192
    %v219 = vsel %vm217, %v216, 0
    %221 = vmatprep.subr.mxu0 0.0
    %222 = vmatpush1.msra.mxu0 %v195
    %223 = vmatprep.subr.mxu0 0.0
    %224 = vmatpush1.msra.mxu0 %v199
    %225 = vmatprep.subr.mxu0 0.0
    %226 = vmatpush1.msra.mxu0 %v203
    %227 = vmatprep.subr.mxu0 0.0
    %228 = vmatpush1.msra.mxu0 %v207
    %229 = vmatprep.subr.mxu0 0.0
    %230 = vmatpush1.msra.mxu0 %v211
    %231 = vmatprep.subr.mxu0 0.0
    %232 = vmatpush1.msra.mxu0 %v215
    %233 = vmatprep.subr.mxu0 0.0
    %234 = vmatpush1.msra.mxu0 0.0
    %235 = vmatprep.subr.mxu0 0.0
    %236 = vmatpush1.msra.mxu0 0.0
    %237 = vmatprep.subr.mxu0 0.0
    %238 = vmatpush1.msra.mxu0 0.0
    %239 = vmatprep.subr.mxu0 0.0
    %240 = vmatpush1.msra.mxu0 0.0
    %241 = vmatprep.subr.mxu0 0.0
    %242 = vmatpush1.msra.mxu0 0.0
    %243 = vmatprep.subr.mxu0 0.0
    %244 = vmatpush1.msra.mxu0 0.0
    %245 = vmatprep.subr.mxu0 0.0
    %246 = vmatpush1.msra.mxu0 0.0
    %247 = vmatprep.subr.mxu0 0.0
    %248 = vmatpush1.msra.mxu0 0.0
    %249 = vmatprep.subr.mxu0 0.0
    %250 = vmatpush1.msra.mxu0 0.0
    %251 = vmatprep.subr.mxu0 0.0
    %252 = vmatpush1.msra.mxu0 0.0
    %253 = vmatprep.subr.mxu0 0.0
    %254 = vmatpush1.msra.mxu0 0.0
    %255 = vmatprep.subr.mxu0 0.0
    %256 = vmatpush1.msra.mxu0 0.0
    %257 = vmatprep.subr.mxu0 0.0
    %258 = vmatpush1.msra.mxu0 0.0
    %259 = vmatprep.subr.mxu0 0.0
    %260 = vmatpush1.msra.mxu0 0.0
    %261 = vmatprep.subr.mxu0 0.0
    %262 = vmatpush1.msra.mxu0 0.0
    %263 = vmatprep.subr.mxu0 0.0
    %264 = vmatpush1.msra.mxu0 0.0
    %265 = vmatprep.subr.mxu0 0.0
    %266 = vmatpush1.msra.mxu0 0.0
    %267 = vmatprep.subr.mxu0 0.0
    %268 = vmatpush1.msra.mxu0 0.0
    %269 = vmatprep.subr.mxu0 0.0
    %270 = vmatpush1.msra.mxu0 0.0
    %271 = vmatprep.subr.mxu0 0.0
    %272 = vmatpush1.msra.mxu0 0.0
    %273 = vmatprep.subr.mxu0 0.0
    %274 = vmatpush1.msra.mxu0 0.0
    %275 = vmatprep.subr.mxu0 0.0
    %276 = vmatpush1.msra.mxu0 0.0
    %277 = vmatprep.subr.mxu0 0.0
    %278 = vmatpush1.msra.mxu0 0.0
    %279 = vmatprep.subr.mxu0 0.0
    %280 = vmatpush1.msra.mxu0 0.0
    %281 = vmatprep.subr.mxu0 0.0
    %282 = vmatpush1.msra.mxu0 0.0
    %283 = vmatprep.subr.mxu0 0.0
    %284 = vmatpush1.msra.mxu0 0.0
    %285 = vmatprep.mubr.f32.mxu0 0.0
    %286 = vmatmul.mubr.f32.gmra.mrb[0].mxu0 %v219
    %v287 = vpop.f32.mrb[0].mxu0
    %v288 = vadd.f32 0.0, %v287
    %v289 = vpop.f32.mrb[0].mxu0
    %290 = vdwg.mxu0
    %v291 = vtanh.pop %v288
    %v292 = vadd.f32 %v291, 0.0
    %vm293 = vcmp.ge.f32.partialorder %v292, -1.0
    %vm294 = vcmp.ge.f32.partialorder %v292, -0.6
    %vm295 = vcmp.ge.f32.partialorder %v292, -0.2
    %vm296 = vcmp.ge.f32.partialorder %v292, 0.2
    %vm297 = vcmp.ge.f32.partialorder %v292, 0.6
    %vm298 = vcmp.ge.f32.partialorder %v292, 1.0
    %vm299 = vcmp.ge.f32.partialorder %v292, 1.4
    %vm300 = vcmp.ge.f32.partialorder %v292, 1.8
    %vm301 = vcmp.ge.f32.partialorder %v292, 2.2
    %vm302 = vcmp.ge.f32.partialorder %v292, 2.6
    %vm303 = vmxor %vm294, 1
    %vm304 = vmand %vm293, %vm303
    %v305 = vsel %vm304, 1, 0
    %v306 = vcvt.s32.f32 %v305
    %vm307 = vmxor %vm295, 1
    %vm308 = vmand %vm294, %vm307
    %v309 = vsel %vm308, 1, 0
    %v310 = vcvt.s32.f32 %v309
    %vm311 = vmxor %vm296, 1
    %vm312 = vmand %vm295, %vm311
    %v313 = vsel %vm312, 1, 0
    %v314 = vcvt.s32.f32 %v313
    %vm315 = vmxor %vm297, 1
    %vm316 = vmand %vm296, %vm315
    %v317 = vsel %vm316, 1, 0
    %v318 = vcvt.s32.f32 %v317
    %vm319 = vmxor %vm298, 1
    %vm320 = vmand %vm297, %vm319
    %v321 = vsel %vm320, 1, 0
    %v322 = vcvt.s32.f32 %v321
    %vm323 = vmxor %vm299, 1
    %vm324 = vmand %vm298, %vm323
    %v325 = vsel %vm324, 1, 0
    %v326 = vcvt.s32.f32 %v325
    %vm327 = vmxor %vm300, 1
    %vm328 = vmand %vm299, %vm327
    %v329 = vsel %vm328, 1, 0
    %v330 = vcvt.s32.f32 %v329
    %vm331 = vmxor %vm301, 1
    %vm332 = vmand %vm300, %vm331
    %v333 = vsel %vm332, 1, 0
    %v334 = vcvt.s32.f32 %v333
    %vm335 = vmxor %vm302, 1
    %vm336 = vmand %vm301, %vm335
    %v337 = vsel %vm336, 1, 0
    %v338 = vcvt.s32.f32 %v337
    %v339 = vsub.f32 %v292, -1.0
    %v340 = vmul.f32 %v339, 2.5
    %v341 = vsub.f32 %v292, -0.6
    %v342 = vmul.f32 %v341, 2.5
    %v343 = vsub.f32 %v292, -0.2
    %v344 = vmul.f32 %v343, 2.5
    %v345 = vsub.f32 %v292, 0.2
    %v346 = vmul.f32 %v345, 2.5
    %v347 = vsub.f32 %v292, 0.6
    %v348 = vmul.f32 %v347, 2.5
    %v349 = vsub.f32 %v292, 1.0
    %v350 = vmul.f32 %v349, 2.5
    %v351 = vsub.f32 %v292, 1.4
    %v352 = vmul.f32 %v351, 2.5
    %v353 = vsub.f32 %v292, 1.8
    %v354 = vmul.f32 %v353, 2.5
    %v355 = vsub.f32 %v292, 2.2
    %v356 = vmul.f32 %v355, 2.5
    %v357 = vmul.f32 %v340, %v306
    %v358 = vsub.f32 1.0, %v342
    %v359 = vmul.f32 %v358, %v310
    %v360 = vadd.f32 %v357, %v359
    %v361 = vmul.f32 %v342, %v310
    %v362 = vsub.f32 1.0, %v344
    %v363 = vmul.f32 %v362, %v314
    %v364 = vadd.f32 %v361, %v363
    %v365 = vmul.f32 %v344, %v314
    %v366 = vsub.f32 1.0, %v346
    %v367 = vmul.f32 %v366, %v318
    %v368 = vadd.f32 %v365, %v367
    %v369 = vmul.f32 %v346, %v318
    %v370 = vsub.f32 1.0, %v348
    %v371 = vmul.f32 %v370, %v322
    %v372 = vadd.f32 %v369, %v371
    %v373 = vmul.f32 %v348, %v322
    %v374 = vsub.f32 1.0, %v350
    %v375 = vmul.f32 %v374, %v326
    %v376 = vadd.f32 %v373, %v375
    %v377 = vmul.f32 %v350, %v326
    %v378 = vsub.f32 1.0, %v352
    %v379 = vmul.f32 %v378, %v330
    %v380 = vadd.f32 %v377, %v379
    %v381 = vmul.f32 %v352, %v330
    %v382 = vsub.f32 1.0, %v354
    %v383 = vmul.f32 %v382, %v334
    %v384 = vadd.f32 %v381, %v383
    %v385 = vmul.f32 %v354, %v334
    %v386 = vsub.f32 1.0, %v356
    %v387 = vmul.f32 %v386, %v338
    %v388 = vadd.f32 %v385, %v387
    %v389 = vmul.f32 %v339, 1.25
    %v390 = vmul.f32 %v341, 1.25
    %v391 = vmul.f32 %v343, 1.25
    %v392 = vmul.f32 %v345, 1.25
    %v393 = vmul.f32 %v347, 1.25
    %v394 = vmul.f32 %v349, 1.25
    %v395 = vmul.f32 %v351, 1.25
    %v396 = vmul.f32 %v353, 1.25
    %v397 = vmul.f32 %v389, %v360
    %v398 = vsub.f32 1.0, %v390
    %v399 = vmul.f32 %v398, %v364
    %v400 = vadd.f32 %v397, %v399
    %v401 = vmul.f32 %v390, %v364
    %v402 = vsub.f32 1.0, %v391
    %v403 = vmul.f32 %v402, %v368
    %v404 = vadd.f32 %v401, %v403
    %v405 = vmul.f32 %v391, %v368
    %v406 = vsub.f32 1.0, %v392
    %v407 = vmul.f32 %v406, %v372
    %v408 = vadd.f32 %v405, %v407
    %v409 = vmul.f32 %v392, %v372
    %v410 = vsub.f32 1.0, %v393
    %v411 = vmul.f32 %v410, %v376
    %v412 = vadd.f32 %v409, %v411
    %v413 = vmul.f32 %v393, %v376
    %v414 = vsub.f32 1.0, %v394
    %v415 = vmul.f32 %v414, %v380
    %v416 = vadd.f32 %v413, %v415
    %v417 = vmul.f32 %v394, %v380
    %v418 = vsub.f32 1.0, %v395
    %v419 = vmul.f32 %v418, %v384
    %v420 = vadd.f32 %v417, %v419
    %v421 = vmul.f32 %v395, %v384
    %v422 = vsub.f32 1.0, %v396
    %v423 = vmul.f32 %v422, %v388
    %v424 = vadd.f32 %v421, %v423
    %v425 = vmul.f32 %v339, 0.8333333
    %v426 = vmul.f32 %v341, 0.8333333
    %v427 = vmul.f32 %v343, 0.8333333
    %v428 = vmul.f32 %v345, 0.8333333
    %v429 = vmul.f32 %v347, 0.8333333
    %v430 = vmul.f32 %v349, 0.8333333
    %v431 = vmul.f32 %v351, 0.8333333
    %v432 = vmul.f32 %v425, %v400
    %v433 = vsub.f32 1.0, %v426
    %v434 = vmul.f32 %v433, %v404
    %v435 = vadd.f32 %v432, %v434
    %v436 = vmul.f32 %v426, %v404
    %v437 = vsub.f32 1.0, %v427
    %v438 = vmul.f32 %v437, %v408
    %v439 = vadd.f32 %v436, %v438
    %v440 = vmul.f32 %v427, %v408
    %v441 = vsub.f32 1.0, %v428
    %v442 = vmul.f32 %v441, %v412
    %v443 = vadd.f32 %v440, %v442
    %v444 = vmul.f32 %v428, %v412
    %v445 = vsub.f32 1.0, %v429
    %v446 = vmul.f32 %v445, %v416
    %v447 = vadd.f32 %v444, %v446
    %v448 = vmul.f32 %v429, %v416
    %v449 = vsub.f32 1.0, %v430
    %v450 = vmul.f32 %v449, %v420
    %v451 = vadd.f32 %v448, %v450
    %v452 = vmul.f32 %v430, %v420
    %v453 = vsub.f32 1.0, %v431
    %v454 = vmul.f32 %v453, %v424
    %v455 = vadd.f32 %v452, %v454
    %v456 = vld [vmem:[#allocation7] sm:$0xff]
    %v458 = vsel %vm217, %v456, 0
    %460 = vmatprep.subr.mxu0 0.0
    %461 = vmatpush1.msra.mxu0 %v435
    %462 = vmatprep.subr.mxu0 0.0
    %463 = vmatpush1.msra.mxu0 %v439
    %464 = vmatprep.subr.mxu0 0.0
    %465 = vmatpush1.msra.mxu0 %v443
    %466 = vmatprep.subr.mxu0 0.0
    %467 = vmatpush1.msra.mxu0 %v447
    %468 = vmatprep.subr.mxu0 0.0
    %469 = vmatpush1.msra.mxu0 %v451
    %470 = vmatprep.subr.mxu0 0.0
    %471 = vmatpush1.msra.mxu0 %v455
    %472 = vmatprep.subr.mxu0 0.0
    %473 = vmatpush1.msra.mxu0 0.0
    %474 = vmatprep.subr.mxu0 0.0
    %475 = vmatpush1.msra.mxu0 0.0
    %476 = vmatprep.subr.mxu0 0.0
    %477 = vmatpush1.msra.mxu0 0.0
    %478 = vmatprep.subr.mxu0 0.0
    %479 = vmatpush1.msra.mxu0 0.0
    %480 = vmatprep.subr.mxu0 0.0
    %481 = vmatpush1.msra.mxu0 0.0
    %482 = vmatprep.subr.mxu0 0.0
    %483 = vmatpush1.msra.mxu0 0.0
    %484 = vmatprep.subr.mxu0 0.0
    %485 = vmatpush1.msra.mxu0 0.0
    %486 = vmatprep.subr.mxu0 0.0
    %487 = vmatpush1.msra.mxu0 0.0
    %488 = vmatprep.subr.mxu0 0.0
    %489 = vmatpush1.msra.mxu0 0.0
    %490 = vmatprep.subr.mxu0 0.0
    %491 = vmatpush1.msra.mxu0 0.0
    %492 = vmatprep.subr.mxu0 0.0
    %493 = vmatpush1.msra.mxu0 0.0
    %494 = vmatprep.subr.mxu0 0.0
    %495 = vmatpush1.msra.mxu0 0.0
    %496 = vmatprep.subr.mxu0 0.0
    %497 = vmatpush1.msra.mxu0 0.0
    %498 = vmatprep.subr.mxu0 0.0
    %499 = vmatpush1.msra.mxu0 0.0
    %500 = vmatprep.subr.mxu0 0.0
    %501 = vmatpush1.msra.mxu0 0.0
    %502 = vmatprep.subr.mxu0 0.0
    %503 = vmatpush1.msra.mxu0 0.0
    %504 = vmatprep.subr.mxu0 0.0
    %505 = vmatpush1.msra.mxu0 0.0
    %506 = vmatprep.subr.mxu0 0.0
    %507 = vmatpush1.msra.mxu0 0.0
    %508 = vmatprep.subr.mxu0 0.0
    %509 = vmatpush1.msra.mxu0 0.0
    %510 = vmatprep.subr.mxu0 0.0
    %511 = vmatpush1.msra.mxu0 0.0
    %512 = vmatprep.subr.mxu0 0.0
    %513 = vmatpush1.msra.mxu0 0.0
    %514 = vmatprep.subr.mxu0 0.0
    %515 = vmatpush1.msra.mxu0 0.0
    %516 = vmatprep.subr.mxu0 0.0
    %517 = vmatpush1.msra.mxu0 0.0
    %518 = vmatprep.subr.mxu0 0.0
    %519 = vmatpush1.msra.mxu0 0.0
    %520 = vmatprep.subr.mxu0 0.0
    %521 = vmatpush1.msra.mxu0 0.0
    %522 = vmatprep.subr.mxu0 0.0
    %523 = vmatpush1.msra.mxu0 0.0
    %524 = vmatprep.mubr.f32.mxu0 0.0
    %525 = vmatmul.mubr.f32.gmra.mrb[0].mxu0 %v458
    %v526 = vpop.f32.mrb[0].mxu0
    %v527 = vadd.f32 0.0, %v526
    %v528 = vpop.f32.mrb[0].mxu0
    %529 = vdwg.mxu0
    %530 = vst [vmem:[#allocation8] sm:$0xff] %v527
    // Predicated region
    $region26: #{tpu_custom_call.1} parent=1 // pred_check
      _
    $region27: #{tpu_custom_call.1} parent=1 // pred_check_branch
      %532 = sbr.rel (0) target = $region29
    $region28: #{tpu_custom_call.1} parent=1 // pred_region
      %s534 = ssub.s32 128, 128
      %535 = vsyncadd [#allocation4], %s534
      %s537 = sshll.u32 [#allocation8], 4
      %s538 = int_to_ptr.vmem [resolvable:$true] %s537
      %540 = dma.vmem_to_hbm [thread:$0]  %s538, 128, %s3, [#allocation4]
    $region29: #{tpu_custom_call.1} parent=1 // pred_fallthru
      _
    // Predicated region
    $region30: #{tpu_custom_call.1} parent=1 // pred_check
      _
    $region31: #{tpu_custom_call.1} parent=1 // pred_check_branch
      %542 = sbr.rel (0) target = $region33
    $region32: #{tpu_custom_call.1} parent=1 // pred_region
      %543 = dma.done [#allocation4], 128
    $region33: #{tpu_custom_call.1} parent=1 // pred_fallthru
      _
    %544 = vsyncpa [#allocation3], 1
    %545 = vsyncpa [#allocation6], 1
    %546 = vsyncpa [#allocation4], 1

</llo_original>
